<compile_context>
chip_gen: v7x
topology: tpu7x:2x2x1
jax: 0.10.0
libtpu: 0.0.40
codegen_flags: <defaults>
</compile_context>

<pallas_src>
import jax
import jax.numpy as jnp
from jax.experimental import pallas as pl
from jax.experimental.pallas import tpu as pltpu

_H = 128      # native hidden width of layer 1 and padded width of layers 2/3/out
_EPS = 1e-5


def _round_up(v, m):
    return (v + m - 1) // m * m


# ----------------------------------------------------------------------------
# Kernel
# ----------------------------------------------------------------------------

def _fwnn_kernel(x_ref, w_ref, b_ref, o_ref):
    # x tile: (TB, D_pad); weight slab: (D_pad + 3*128, 128); bias slab: (4, 128)
    d_pad = x_ref.shape[1]          # wrapper guarantees multiple of 8
    wdt = w_ref.dtype

    # All weight slices start/end on 8-row boundaries -> free views.
    w1 = w_ref[0:d_pad, :]                           # (D_pad, 128)
    w2 = w_ref[d_pad:d_pad + _H, :]                  # (128, 128)  (64-wide, 0-padded)
    w3 = w_ref[d_pad + _H:d_pad + 2 * _H, :]         # (128, 128)  (32-wide, 0-padded)
    w4 = w_ref[d_pad + 2 * _H:d_pad + 3 * _H, :]     # (128, 128)  (C-wide,  0-padded)

    b = b_ref[...]                                   # (4, 128) f32
    x = x_ref[...]

    # Linear(D,128)  [feature-weights + BN0 + BN1 folded in],  ReLU
    h = jnp.dot(x, w1, preferred_element_type=jnp.float32) + b[0:1, :]
    h = jnp.maximum(h, 0.0)

    # Linear(128,64) + BN(64) folded, ReLU  (lane-padded to 128)
    h = jnp.dot(h.astype(wdt), w2, preferred_element_type=jnp.float32) + b[1:2, :]
    h = jnp.maximum(h, 0.0)

    # Linear(64,32) + BN(32) folded, ReLU  (lane-padded to 128)
    h = jnp.dot(h.astype(wdt), w3, preferred_element_type=jnp.float32) + b[2:3, :]
    h = jnp.maximum(h, 0.0)

    # Final Linear(32, num_classes)  (lane-padded to 128)
    out = jnp.dot(h.astype(wdt), w4, preferred_element_type=jnp.float32) + b[3:4, :]
    o_ref[...] = out.astype(o_ref.dtype)


# ----------------------------------------------------------------------------
# Wrapper
# ----------------------------------------------------------------------------

def _pick_batch_tile(B, tb, align):
    """Batch-tile heuristic: big tiles, no forced split for small batches,
    even grid length for v7x megacore when each step still gets >= 256 rows."""
    tb = max(align, _round_up(tb, align))
    if B <= tb:
        return _round_up(B, align)        # single grid step
    grid = pl.cdiv(B, tb)
    if grid % 2 == 1:
        cand = _round_up(pl.cdiv(B, grid + 1), align)
        if cand >= 256:
            return cand
    return tb


def feature_weighted_nn_forward(x, params, *, tb=1024, out_dtype=jnp.float32,
                                padded_output=False):
    """x: (B, D) float.  params: output of build_params (packed, folded slabs)."""
    B, D = x.shape
    w_all = params["w_all"]
    b_all = params["b_all"]
    d_pad = params["d_pad"]
    num_classes = params["num_classes"]

    x = x.astype(w_all.dtype)

    # bf16 blocks want native (16,128) tiles; f32 wants (8,128).
    align = 16 if w_all.dtype == jnp.bfloat16 else 8

    tb_eff = _pick_batch_tile(B, tb, align)
    B_pad = _round_up(B, tb_eff)

    pad_rows = B_pad - B
    pad_cols = d_pad - D
    if pad_rows or pad_cols:
        x = jnp.pad(x, ((0, pad_rows), (0, pad_cols)))

    out = pl.pallas_call(
        _fwnn_kernel,
        out_shape=jax.ShapeDtypeStruct((B_pad, _H), out_dtype),
        grid_spec=pltpu.PrefetchScalarGridSpec(
            num_scalar_prefetch=0,
            grid=(B_pad // tb_eff,),
            in_specs=[
                pl.BlockSpec((tb_eff, d_pad), lambda i: (i, 0)),   # x (batch-tiled)
                pl.BlockSpec(w_all.shape, lambda i: (0, 0)),       # packed weights
                pl.BlockSpec(b_all.shape, lambda i: (0, 0)),       # packed biases
            ],
            out_specs=pl.BlockSpec((tb_eff, _H), lambda i: (i, 0)),
        ),
        compiler_params=pltpu.CompilerParams(
            dimension_semantics=("parallel",)),
    )(x, w_all, b_all)

    if padded_output:
        return out                        # (B_pad, 128); lanes >= C are exactly 0
    return out[:B, :num_classes]


# ----------------------------------------------------------------------------
# Parameter construction: raw (PyTorch-shaped) params + folded/packed slabs.
# ----------------------------------------------------------------------------

def _bn_fold(w_t, b, bn):
    """(x @ w_t + b) followed by eval-mode BatchNorm -> folded (w_t', b')."""
    gamma, beta, mean, var = bn
    s = gamma / jnp.sqrt(var + _EPS)
    return w_t * s[None, :], b * s + (beta - mean * s)


def build_params(key, input_dim=8, num_classes=3, param_dtype=jnp.float32):
    """Deterministic synthetic params matching the PyTorch module's shapes."""
    ks = jax.random.split(key, 16)

    def lin(kw, kb, fan_in, fan_out):
        bound = 1.0 / jnp.sqrt(fan_in)
        w = jax.random.uniform(kw, (fan_out, fan_in), jnp.float32, -bound, bound)
        b = jax.random.uniform(kb, (fan_out,), jnp.float32, -bound, bound)
        return w, b

    def bn(kg, kb, dim):
        gamma = 1.0 + 0.1 * jax.random.normal(kg, (dim,), jnp.float32)
        beta = 0.1 * jax.random.normal(kb, (dim,), jnp.float32)
        mean = jnp.zeros((dim,), jnp.float32)   # fresh running stats
        var = jnp.ones((dim,), jnp.float32)
        return gamma, beta, mean, var

    feature_weights = jnp.ones((1, input_dim), jnp.float32)  # ftr_importance=None

    bn0 = bn(ks[0], ks[1], input_dim)
    w1, b1 = lin(ks[2], ks[3], input_dim, 128)
    bn1 = bn(ks[4], ks[5], 128)
    w2, b2 = lin(ks[6], ks[7], 128, 64)
    bn2 = bn(ks[8], ks[9], 64)
    w3, b3 = lin(ks[10], ks[11], 64, 32)
    bn3 = bn(ks[12], ks[13], 32)
    w4, b4 = lin(ks[14], ks[15], 32, num_classes)

    raw = {"feature_weights": feature_weights,
           "bn0": bn0, "w1": w1, "b1": b1, "bn1": bn1,
           "w2": w2, "b2": b2, "bn2": bn2,
           "w3": w3, "b3": b3, "bn3": bn3,
           "w4": w4, "b4": b4}

    # --- fold feature weights + BN0 into layer-1 linear ---------------------
    g0, be0, m0, v0 = bn0
    s0 = g0 / jnp.sqrt(v0 + _EPS)
    a = feature_weights[0] * s0                # per-feature scale, (D,)
    c = be0 - m0 * s0                          # per-feature shift, (D,)
    w1t = a[:, None] * w1.T                    # (D, 128)
    b1v = c @ w1.T + b1                        # (128,)
    w1f, b1f = _bn_fold(w1t, b1v, bn1)

    w2f, b2f = _bn_fold(w2.T, b2, bn2)         # (128, 64)
    w3f, b3f = _bn_fold(w3.T, b3, bn3)         # (64, 32)
    w4f, b4f = w4.T, b4                        # (32, C)

    # --- zero-pad narrow widths to 128 lanes / 8-row alignment --------------
    d_pad = _round_up(input_dim, 8)

    def pad2(w, rows, cols):
        return jnp.pad(w, ((0, rows - w.shape[0]), (0, cols - w.shape[1])))

    def pad1(b, cols):
        return jnp.pad(b, (0, cols - b.shape[0]))

    w1p = pad2(w1f, d_pad, _H)                 # (D_pad, 128)  zero rows past D
    w2p = pad2(w2f, _H, _H)                    # (128, 128)
    w3p = pad2(w3f, _H, _H)                    # (128, 128)
    w4p = pad2(w4f, _H, _H)                    # (128, 128)

    w_all = jnp.concatenate([w1p, w2p, w3p, w4p], axis=0).astype(param_dtype)
    b_all = jnp.stack([pad1(b1f, _H), pad1(b2f, _H),
                       pad1(b3f, _H), pad1(b4f, _H)], axis=0).astype(jnp.float32)

    return {"w_all": w_all, "b_all": b_all, "d_pad": d_pad,
            "num_classes": num_classes, "raw": raw}


def reference_forward(x, raw):
    """Pure-JAX reference of the original (unfolded) eval-mode module."""
    def bn_eval(h, p):
        g, be, m, v = p
        return (h - m) / jnp.sqrt(v + _EPS) * g + be

    h = x * raw["feature_weights"]
    h = bn_eval(h, raw["bn0"])
    h = jnp.maximum(bn_eval(h @ raw["w1"].T + raw["b1"], raw["bn1"]), 0.0)
    h = jnp.maximum(bn_eval(h @ raw["w2"].T + raw["b2"], raw["bn2"]), 0.0)
    h = jnp.maximum(bn_eval(h @ raw["w3"].T + raw["b3"], raw["bn3"]), 0.0)
    return h @ raw["w4"].T + raw["b4"]


if __name__ == "__main__":
    key = jax.random.PRNGKey(0)
    kx, kp = jax.random.split(key)

    B, D, C = 16, 8, 3
    x = jax.random.normal(kx, (B, D), jnp.float32)
    # param_dtype=jnp.bfloat16 / out_dtype=jnp.bfloat16 are supported for
    # v6e/v7x throughput; f32 here so the correctness check against the
    # unfolded reference stays tight.
    params = build_params(kp, input_dim=D, num_classes=C,
                          param_dtype=jnp.float32)

    out = feature_weighted_nn_forward(x, params)
    out = jax.block_until_ready(out)

    ref = reference_forward(x, params["raw"])
    assert out.shape == (B, C)
    assert jnp.allclose(out, ref, atol=1e-4, rtol=1e-4), "mismatch vs JAX reference"

    print("KERNEL_OK")
</pallas_src>

<mosaic_0001>
module attributes {stable_mosaic.version = 11 : i64} {
  func.func @_fwnn_kernel(%arg0: i32, %arg1: memref<16x8xf32, #tpu.memory_space<vmem>>, %arg2: memref<392x128xf32, #tpu.memory_space<vmem>>, %arg3: memref<4x128xf32, #tpu.memory_space<vmem>>, %arg4: memref<16x128xf32, #tpu.memory_space<vmem>>) attributes {dimension_semantics = [#tpu.dimension_semantics<parallel>], iteration_bounds = array<i64: 1>, scalar_prefetch = 0 : i64, scratch_operands = 0 : i64, tpu.core_type = #tpu.core_type<tc>, window_params = [{transform_indices = @transform_0, window_bounds = array<i64: 16, 8>}, {pipeline_mode = #tpu.pipeline_mode<synchronous>, transform_indices = @transform_1, window_bounds = array<i64: 392, 128>}, {pipeline_mode = #tpu.pipeline_mode<synchronous>, transform_indices = @transform_2, window_bounds = array<i64: 4, 128>}, {transform_indices = @transform_3, window_bounds = array<i64: 16, 128>}]} {
    %c0 = arith.constant 0 : index
    %c0_0 = arith.constant 0 : index
    %0 = vector.load %arg2[%c0, %c0_0] : memref<392x128xf32, #tpu.memory_space<vmem>>, vector<8x128xf32>
    %c8 = arith.constant 8 : index
    %c0_1 = arith.constant 0 : index
    %1 = vector.load %arg2[%c8, %c0_1] : memref<392x128xf32, #tpu.memory_space<vmem>>, vector<128x128xf32>
    %c136 = arith.constant 136 : index
    %c0_2 = arith.constant 0 : index
    %2 = vector.load %arg2[%c136, %c0_2] : memref<392x128xf32, #tpu.memory_space<vmem>>, vector<128x128xf32>
    %c264 = arith.constant 264 : index
    %c0_3 = arith.constant 0 : index
    %3 = vector.load %arg2[%c264, %c0_3] : memref<392x128xf32, #tpu.memory_space<vmem>>, vector<128x128xf32>
    %c0_4 = arith.constant 0 : index
    %c0_5 = arith.constant 0 : index
    %4 = vector.load %arg3[%c0_4, %c0_5] : memref<4x128xf32, #tpu.memory_space<vmem>>, vector<4x128xf32>
    %c0_6 = arith.constant 0 : index
    %c0_7 = arith.constant 0 : index
    %5 = vector.load %arg1[%c0_6, %c0_7] : memref<16x8xf32, #tpu.memory_space<vmem>>, vector<16x8xf32>
    %cst = arith.constant dense<0.000000e+00> : vector<16x128xf32>
    %6 = tpu.matmul %5, %0, %cst {dimension_numbers = #tpu.dot_dimension_numbers<[1], [0], [0], [1], [0, 0, 1, 1], [], []>} : vector<16x8xf32>, vector<8x128xf32>, vector<16x128xf32> -> vector<16x128xf32>
    %7 = vector.extract_strided_slice %4 {offsets = [0, 0], sizes = [1, 128], strides = [1, 1]} : vector<4x128xf32> to vector<1x128xf32>
    %8 = vector.broadcast %7 : vector<1x128xf32> to vector<16x128xf32>
    %9 = arith.addf %6, %8 : vector<16x128xf32>
    %cst_8 = arith.constant 0.000000e+00 : f32
    %10 = vector.broadcast %cst_8 : f32 to vector<16x128xf32>
    %11 = arith.maximumf %9, %10 : vector<16x128xf32>
    %cst_9 = arith.constant dense<0.000000e+00> : vector<16x128xf32>
    %12 = tpu.matmul %11, %1, %cst_9 {dimension_numbers = #tpu.dot_dimension_numbers<[1], [0], [0], [1], [0, 0, 1, 1], [], []>} : vector<16x128xf32>, vector<128x128xf32>, vector<16x128xf32> -> vector<16x128xf32>
    %13 = vector.extract_strided_slice %4 {offsets = [1, 0], sizes = [1, 128], strides = [1, 1]} : vector<4x128xf32> to vector<1x128xf32>
    %14 = vector.broadcast %13 : vector<1x128xf32> to vector<16x128xf32>
    %15 = arith.addf %12, %14 : vector<16x128xf32>
    %cst_10 = arith.constant 0.000000e+00 : f32
    %16 = vector.broadcast %cst_10 : f32 to vector<16x128xf32>
    %17 = arith.maximumf %15, %16 : vector<16x128xf32>
    %cst_11 = arith.constant dense<0.000000e+00> : vector<16x128xf32>
    %18 = tpu.matmul %17, %2, %cst_11 {dimension_numbers = #tpu.dot_dimension_numbers<[1], [0], [0], [1], [0, 0, 1, 1], [], []>} : vector<16x128xf32>, vector<128x128xf32>, vector<16x128xf32> -> vector<16x128xf32>
    %19 = vector.extract_strided_slice %4 {offsets = [2, 0], sizes = [1, 128], strides = [1, 1]} : vector<4x128xf32> to vector<1x128xf32>
    %20 = vector.broadcast %19 : vector<1x128xf32> to vector<16x128xf32>
    %21 = arith.addf %18, %20 : vector<16x128xf32>
    %cst_12 = arith.constant 0.000000e+00 : f32
    %22 = vector.broadcast %cst_12 : f32 to vector<16x128xf32>
    %23 = arith.maximumf %21, %22 : vector<16x128xf32>
    %cst_13 = arith.constant dense<0.000000e+00> : vector<16x128xf32>
    %24 = tpu.matmul %23, %3, %cst_13 {dimension_numbers = #tpu.dot_dimension_numbers<[1], [0], [0], [1], [0, 0, 1, 1], [], []>} : vector<16x128xf32>, vector<128x128xf32>, vector<16x128xf32> -> vector<16x128xf32>
    %25 = vector.extract_strided_slice %4 {offsets = [3, 0], sizes = [1, 128], strides = [1, 1]} : vector<4x128xf32> to vector<1x128xf32>
    %26 = vector.broadcast %25 : vector<1x128xf32> to vector<16x128xf32>
    %27 = arith.addf %24, %26 : vector<16x128xf32>
    %c0_14 = arith.constant 0 : index
    %c0_15 = arith.constant 0 : index
    %28 = vector.load %arg4[%c0_14, %c0_15] : memref<16x128xf32, #tpu.memory_space<vmem>>, vector<16x128xf32>
    tpu.vector_store %arg4[%c0_14, %c0_15], %27 {strides = array<i32>} : memref<16x128xf32, #tpu.memory_space<vmem>>, vector<16x128xf32>,
    return
  }
  func.func @transform_0(%arg0: i32) -> (i32, i32) {
    %c0_i32 = arith.constant 0 : i32
    %c0_i32_0 = arith.constant 0 : i32
    return %arg0, %c0_i32 : i32, i32
  }
  func.func @transform_1(%arg0: i32) -> (i32, i32) {
    %c0_i32 = arith.constant 0 : i32
    %c0_i32_0 = arith.constant 0 : i32
    %c0_i32_1 = arith.constant 0 : i32
    return %c0_i32, %c0_i32_0 : i32, i32
  }
  func.func @transform_2(%arg0: i32) -> (i32, i32) {
    %c0_i32 = arith.constant 0 : i32
    %c0_i32_0 = arith.constant 0 : i32
    %c0_i32_1 = arith.constant 0 : i32
    return %c0_i32, %c0_i32_0 : i32, i32
  }
  func.func @transform_3(%arg0: i32) -> (i32, i32) {
    %c0_i32 = arith.constant 0 : i32
    %c0_i32_0 = arith.constant 0 : i32
    return %arg0, %c0_i32 : i32, i32
  }
}

</mosaic_0001>

<llo_original>
// kernel: tpu_custom_call.1
$region0: #{tpu_custom_call.1}
  #allocation0 [shape = 'u32[]', space=smem, size = 0x4, offset = 0x4, fixed_abs, tag = 'smem constant byte address 0x4 - core index']
  #allocation1 [shape = 'u32[144,128]{1,0:T(1,128)}', space=vmem, size = 0x12000, scoped, tag = 'internal scratch']
  %s0 = inlined_call_operand.vmem [shape: f32[16,8], index: 0, kind: input, shape index: {}]
  %s1 = inlined_call_operand.hbm [shape: f32[392,128], index: 1, kind: input, shape index: {}]
  %s2 = inlined_call_operand.vmem [shape: f32[4,128], index: 2, kind: input, shape index: {}]
  %s3 = inlined_call_operand.hbm [shape: f32[16,128], index: 3, kind: output, shape index: {}]
  %s4 = sld [smem:[#allocation0]]
  $region26: #{tpu_custom_call.1} parent=0
    _
  %s6 = ssub.s32 1, %s4
  %s7 = scalar_select 0, %s6, %s4
  $region1: #{tpu_custom_call.1} parent=0
    #allocation2 [shape = 'u8[200704]{0}', space=vmem, size = 0x31000, scoped, tag = 'input window, operand 1, single buffered']
    #allocation3 [shape = 's32[1]{0}', space=sflag, size = 0x4, scoped, tag = 'scoped memory for tpu_custom_call.1']
    #allocation4 [shape = 's32[1]{0}', space=sflag, size = 0x4, scoped, tag = 'scoped memory for tpu_custom_call.1']
    #allocation5 [shape = 'u8[8192]{0}', space=vmem, size = 0x2000, scoped, tag = 'output window, operand 0, single buffered']
    %8 = vsyncpa [#allocation3], 0
    %9 = vsyncpa [#allocation4], 0
    // Predicated region
    $region2: #{tpu_custom_call.1} parent=1 // pred_check
      _
    $region3: #{tpu_custom_call.1} parent=1 // pred_check_branch
      %11 = sbr.rel (0) target = $region5
    $region4: #{tpu_custom_call.1} parent=1 // pred_region
      _
    $region5: #{tpu_custom_call.1} parent=1 // pred_fallthru
      _
    // Predicated region
    $region6: #{tpu_custom_call.1} parent=1 // pred_check
      _
    $region7: #{tpu_custom_call.1} parent=1 // pred_check_branch
      %13 = sbr.rel (0) target = $region9
    $region8: #{tpu_custom_call.1} parent=1 // pred_region
      %s15 = ssub.s32 6272, 6272
      %16 = vsyncadd [#allocation3], %s15
      %s17 = sshll.u32 [#allocation2], 4
      %s18 = int_to_ptr.vmem [resolvable:$true] %s17
      %23 = dma.hbm_to_vmem [thread:$0]  %s1, 6272, %s18, [#allocation3], 128, 128, 8
    $region9: #{tpu_custom_call.1} parent=1 // pred_fallthru
      _
    // Predicated region
    $region10: #{tpu_custom_call.1} parent=1 // pred_check
      _
    $region11: #{tpu_custom_call.1} parent=1 // pred_check_branch
      %25 = sbr.rel (0) target = $region13
    $region12: #{tpu_custom_call.1} parent=1 // pred_region
      _
    $region13: #{tpu_custom_call.1} parent=1 // pred_fallthru
      _
    // Predicated region
    $region14: #{tpu_custom_call.1} parent=1 // pred_check
      _
    $region15: #{tpu_custom_call.1} parent=1 // pred_check_branch
      %27 = sbr.rel (0) target = $region17
    $region16: #{tpu_custom_call.1} parent=1 // pred_region
      %28 = dma.done [#allocation3], 6272
    $region17: #{tpu_custom_call.1} parent=1 // pred_fallthru
      _
    %v29 = vld [vmem:[#allocation2] sm:$0xff]
    %v30 = vld [vmem:[#allocation2 + $0x8] sm:$0xff]
    %v31 = vld [vmem:[#allocation2 + $0x10] sm:$0xff]
    %v32 = vld [vmem:[#allocation2 + $0x18] sm:$0xff]
    %v33 = vld [vmem:[#allocation2 + $0x20] sm:$0xff]
    %v34 = vld [vmem:[#allocation2 + $0x28] sm:$0xff]
    %v35 = vld [vmem:[#allocation2 + $0x30] sm:$0xff]
    %v36 = vld [vmem:[#allocation2 + $0x38] sm:$0xff]
    %v37 = vld [vmem:[#allocation2 + $0x40] sm:$0xff]
    %v38 = vld [vmem:[#allocation2 + $0x48] sm:$0xff]
    %v39 = vld [vmem:[#allocation2 + $0x50] sm:$0xff]
    %v40 = vld [vmem:[#allocation2 + $0x58] sm:$0xff]
    %v41 = vld [vmem:[#allocation2 + $0x60] sm:$0xff]
    %v42 = vld [vmem:[#allocation2 + $0x68] sm:$0xff]
    %v43 = vld [vmem:[#allocation2 + $0x70] sm:$0xff]
    %v44 = vld [vmem:[#allocation2 + $0x78] sm:$0xff]
    %v45 = vld [vmem:[#allocation2 + $0x80] sm:$0xff]
    %v46 = vld [vmem:[#allocation2 + $0x88] sm:$0xff]
    %v47 = vld [vmem:[#allocation2 + $0x90] sm:$0xff]
    %v48 = vld [vmem:[#allocation2 + $0x98] sm:$0xff]
    %v49 = vld [vmem:[#allocation2 + $0xa0] sm:$0xff]
    %v50 = vld [vmem:[#allocation2 + $0xa8] sm:$0xff]
    %v51 = vld [vmem:[#allocation2 + $0xb0] sm:$0xff]
    %v52 = vld [vmem:[#allocation2 + $0xb8] sm:$0xff]
    %v53 = vld [vmem:[#allocation2 + $0xc0] sm:$0xff]
    %v54 = vld [vmem:[#allocation2 + $0xc8] sm:$0xff]
    %v55 = vld [vmem:[#allocation2 + $0xd0] sm:$0xff]
    %v56 = vld [vmem:[#allocation2 + $0xd8] sm:$0xff]
    %v57 = vld [vmem:[#allocation2 + $0xe0] sm:$0xff]
    %v58 = vld [vmem:[#allocation2 + $0xe8] sm:$0xff]
    %v59 = vld [vmem:[#allocation2 + $0xf0] sm:$0xff]
    %v60 = vld [vmem:[#allocation2 + $0xf8] sm:$0xff]
    %v61 = vld [vmem:[#allocation2 + $0x100] sm:$0xff]
    %v62 = vld [vmem:[#allocation2 + $0x108] sm:$0xff]
    %v63 = vld [vmem:[#allocation2 + $0x110] sm:$0xff]
    %v64 = vld [vmem:[#allocation2 + $0x118] sm:$0xff]
    %v65 = vld [vmem:[#allocation2 + $0x120] sm:$0xff]
    %v66 = vld [vmem:[#allocation2 + $0x128] sm:$0xff]
    %v67 = vld [vmem:[#allocation2 + $0x130] sm:$0xff]
    %v68 = vld [vmem:[#allocation2 + $0x138] sm:$0xff]
    %v69 = vld [vmem:[#allocation2 + $0x140] sm:$0xff]
    %v70 = vld [vmem:[#allocation2 + $0x148] sm:$0xff]
    %v71 = vld [vmem:[#allocation2 + $0x150] sm:$0xff]
    %v72 = vld [vmem:[#allocation2 + $0x158] sm:$0xff]
    %v73 = vld [vmem:[#allocation2 + $0x160] sm:$0xff]
    %v74 = vld [vmem:[#allocation2 + $0x168] sm:$0xff]
    %v75 = vld [vmem:[#allocation2 + $0x170] sm:$0xff]
    %v76 = vld [vmem:[#allocation2 + $0x178] sm:$0xff]
    %v77 = vld [vmem:[#allocation2 + $0x180] sm:$0xff]
    %v78 = vld [vmem:[%s2] sm:$0xf]
    %v79 = vld [vmem:[%s0] sm:$0xff]
    %v80 = vld [vmem:[%s0 + $0x8] sm:$0xff]
    %v81 = vlaneseq
    %v82 = vshrl.u32 %v81, 7
    %v83 = vsub.s32 0, %v82
    %v84 = vrot.slane %v78, %v83
    %vm85 = vcmask 64512
    %v87 = vsel %vm85, %v79, 0
    %v90 = vsel %vm85, %v80, 0
    %92 = vmatprep.subr.mxu0 0.0
    %93 = vmatpush1.msra.mxu0 %v29
    %94 = vmatprep.subr.mxu0 0.0
    %95 = vmatpush1.msra.mxu0 0.0
    %96 = vmatprep.subr.mxu0 0.0
    %97 = vmatpush1.msra.mxu0 0.0
    %98 = vmatprep.subr.mxu0 0.0
    %99 = vmatpush1.msra.mxu0 0.0
    %100 = vmatprep.subr.mxu0 0.0
    %101 = vmatpush1.msra.mxu0 0.0
    %102 = vmatprep.subr.mxu0 0.0
    %103 = vmatpush1.msra.mxu0 0.0
    %104 = vmatprep.subr.mxu0 0.0
    %105 = vmatpush1.msra.mxu0 0.0
    %106 = vmatprep.subr.mxu0 0.0
    %107 = vmatpush1.msra.mxu0 0.0
    %108 = vmatprep.subr.mxu0 0.0
    %109 = vmatpush1.msra.mxu0 0.0
    %110 = vmatprep.subr.mxu0 0.0
    %111 = vmatpush1.msra.mxu0 0.0
    %112 = vmatprep.subr.mxu0 0.0
    %113 = vmatpush1.msra.mxu0 0.0
    %114 = vmatprep.subr.mxu0 0.0
    %115 = vmatpush1.msra.mxu0 0.0
    %116 = vmatprep.subr.mxu0 0.0
    %117 = vmatpush1.msra.mxu0 0.0
    %118 = vmatprep.subr.mxu0 0.0
    %119 = vmatpush1.msra.mxu0 0.0
    %120 = vmatprep.subr.mxu0 0.0
    %121 = vmatpush1.msra.mxu0 0.0
    %122 = vmatprep.subr.mxu0 0.0
    %123 = vmatpush1.msra.mxu0 0.0
    %124 = vmatprep.subr.mxu0 0.0
    %125 = vmatpush1.msra.mxu0 0.0
    %126 = vmatprep.subr.mxu0 0.0
    %127 = vmatpush1.msra.mxu0 0.0
    %128 = vmatprep.subr.mxu0 0.0
    %129 = vmatpush1.msra.mxu0 0.0
    %130 = vmatprep.subr.mxu0 0.0
    %131 = vmatpush1.msra.mxu0 0.0
    %132 = vmatprep.subr.mxu0 0.0
    %133 = vmatpush1.msra.mxu0 0.0
    %134 = vmatprep.subr.mxu0 0.0
    %135 = vmatpush1.msra.mxu0 0.0
    %136 = vmatprep.subr.mxu0 0.0
    %137 = vmatpush1.msra.mxu0 0.0
    %138 = vmatprep.subr.mxu0 0.0
    %139 = vmatpush1.msra.mxu0 0.0
    %140 = vmatprep.subr.mxu0 0.0
    %141 = vmatpush1.msra.mxu0 0.0
    %142 = vmatprep.subr.mxu0 0.0
    %143 = vmatpush1.msra.mxu0 0.0
    %144 = vmatprep.subr.mxu0 0.0
    %145 = vmatpush1.msra.mxu0 0.0
    %146 = vmatprep.subr.mxu0 0.0
    %147 = vmatpush1.msra.mxu0 0.0
    %148 = vmatprep.subr.mxu0 0.0
    %149 = vmatpush1.msra.mxu0 0.0
    %150 = vmatprep.subr.mxu0 0.0
    %151 = vmatpush1.msra.mxu0 0.0
    %152 = vmatprep.subr.mxu0 0.0
    %153 = vmatpush1.msra.mxu0 0.0
    %154 = vmatprep.subr.mxu0 0.0
    %155 = vmatpush1.msra.mxu0 0.0
    %156 = vmatprep.mubr.f32.mxu0 0.0
    %157 = vmatmul.mubr.f32.gmra.mrb[0].mxu0 %v87
    %v158 = vpop.f32.mrb[0].mxu0
    %v159 = vadd.f32 %v84, %v158
    %v160 = vpop.f32.mrb[0].mxu0
    %161 = vmatprep.mubr.f32.mxu0 0.0
    %162 = vmatmul.mubr.f32.gmra.mrb[0].mxu0 %v90
    %v163 = vpop.f32.mrb[0].mxu0
    %v164 = vadd.f32 %v84, %v163
    %v165 = vpop.f32.mrb[0].mxu0
    %166 = vdwg.mxu0
    %v167 = vmax.f32 %v159, 0.0
    %v168 = vmax.f32 %v164, 0.0
    %v169 = vlaneseq
    %v170 = vshrl.u32 %v169, 7
    %v171 = vsub.s32 1, %v170
    %v172 = vrot.slane %v78, %v171
    %173 = vmatprep.subr.mxu0 0.0
    %174 = vmatpush1.msra.mxu0 %v30
    %175 = vmatprep.subr.mxu0 0.0
    %176 = vmatpush1.msra.mxu0 %v31
    %177 = vmatprep.subr.mxu0 0.0
    %178 = vmatpush1.msra.mxu0 %v32
    %179 = vmatprep.subr.mxu0 0.0
    %180 = vmatpush1.msra.mxu0 %v33
    %181 = vmatprep.subr.mxu0 0.0
    %182 = vmatpush1.msra.mxu0 %v34
    %183 = vmatprep.subr.mxu0 0.0
    %184 = vmatpush1.msra.mxu0 %v35
    %185 = vmatprep.subr.mxu0 0.0
    %186 = vmatpush1.msra.mxu0 %v36
    %187 = vmatprep.subr.mxu0 0.0
    %188 = vmatpush1.msra.mxu0 %v37
    %189 = vmatprep.subr.mxu0 0.0
    %190 = vmatpush1.msra.mxu0 %v38
    %191 = vmatprep.subr.mxu0 0.0
    %192 = vmatpush1.msra.mxu0 %v39
    %193 = vmatprep.subr.mxu0 0.0
    %194 = vmatpush1.msra.mxu0 %v40
    %195 = vmatprep.subr.mxu0 0.0
    %196 = vmatpush1.msra.mxu0 %v41
    %197 = vmatprep.subr.mxu0 0.0
    %198 = vmatpush1.msra.mxu0 %v42
    %199 = vmatprep.subr.mxu0 0.0
    %200 = vmatpush1.msra.mxu0 %v43
    %201 = vmatprep.subr.mxu0 0.0
    %202 = vmatpush1.msra.mxu0 %v44
    %203 = vmatprep.subr.mxu0 0.0
    %204 = vmatpush1.msra.mxu0 %v45
    %205 = vmatprep.subr.mxu0 0.0
    %206 = vmatpush1.msra.mxu0 0.0
    %207 = vmatprep.subr.mxu0 0.0
    %208 = vmatpush1.msra.mxu0 0.0
    %209 = vmatprep.subr.mxu0 0.0
    %210 = vmatpush1.msra.mxu0 0.0
    %211 = vmatprep.subr.mxu0 0.0
    %212 = vmatpush1.msra.mxu0 0.0
    %213 = vmatprep.subr.mxu0 0.0
    %214 = vmatpush1.msra.mxu0 0.0
    %215 = vmatprep.subr.mxu0 0.0
    %216 = vmatpush1.msra.mxu0 0.0
    %217 = vmatprep.subr.mxu0 0.0
    %218 = vmatpush1.msra.mxu0 0.0
    %219 = vmatprep.subr.mxu0 0.0
    %220 = vmatpush1.msra.mxu0 0.0
    %221 = vmatprep.subr.mxu0 0.0
    %222 = vmatpush1.msra.mxu0 0.0
    %223 = vmatprep.subr.mxu0 0.0
    %224 = vmatpush1.msra.mxu0 0.0
    %225 = vmatprep.subr.mxu0 0.0
    %226 = vmatpush1.msra.mxu0 0.0
    %227 = vmatprep.subr.mxu0 0.0
    %228 = vmatpush1.msra.mxu0 0.0
    %229 = vmatprep.subr.mxu0 0.0
    %230 = vmatpush1.msra.mxu0 0.0
    %231 = vmatprep.subr.mxu0 0.0
    %232 = vmatpush1.msra.mxu0 0.0
    %233 = vmatprep.subr.mxu0 0.0
    %234 = vmatpush1.msra.mxu0 0.0
    %235 = vmatprep.subr.mxu0 0.0
    %236 = vmatpush1.msra.mxu0 0.0
    %237 = vmatprep.mubr.f32.mxu0 0.0
    %238 = vmatmul.mubr.f32.gmra.mrb[0].mxu0 %v167
    %v239 = vpop.f32.mrb[0].mxu0
    %v240 = vadd.f32 %v172, %v239
    %v241 = vpop.f32.mrb[0].mxu0
    %242 = vmatprep.mubr.f32.mxu0 0.0
    %243 = vmatmul.mubr.f32.gmra.mrb[0].mxu0 %v168
    %v244 = vpop.f32.mrb[0].mxu0
    %v245 = vadd.f32 %v172, %v244
    %v246 = vpop.f32.mrb[0].mxu0
    %247 = vdwg.mxu0
    %v248 = vmax.f32 %v240, 0.0
    %v249 = vmax.f32 %v245, 0.0
    %v250 = vlaneseq
    %v251 = vshrl.u32 %v250, 7
    %v252 = vsub.s32 2, %v251
    %v253 = vrot.slane %v78, %v252
    %254 = vmatprep.subr.mxu0 0.0
    %255 = vmatpush1.msra.mxu0 %v46
    %256 = vmatprep.subr.mxu0 0.0
    %257 = vmatpush1.msra.mxu0 %v47
    %258 = vmatprep.subr.mxu0 0.0
    %259 = vmatpush1.msra.mxu0 %v48
    %260 = vmatprep.subr.mxu0 0.0
    %261 = vmatpush1.msra.mxu0 %v49
    %262 = vmatprep.subr.mxu0 0.0
    %263 = vmatpush1.msra.mxu0 %v50
    %264 = vmatprep.subr.mxu0 0.0
    %265 = vmatpush1.msra.mxu0 %v51
    %266 = vmatprep.subr.mxu0 0.0
    %267 = vmatpush1.msra.mxu0 %v52
    %268 = vmatprep.subr.mxu0 0.0
    %269 = vmatpush1.msra.mxu0 %v53
    %270 = vmatprep.subr.mxu0 0.0
    %271 = vmatpush1.msra.mxu0 %v54
    %272 = vmatprep.subr.mxu0 0.0
    %273 = vmatpush1.msra.mxu0 %v55
    %274 = vmatprep.subr.mxu0 0.0
    %275 = vmatpush1.msra.mxu0 %v56
    %276 = vmatprep.subr.mxu0 0.0
    %277 = vmatpush1.msra.mxu0 %v57
    %278 = vmatprep.subr.mxu0 0.0
    %279 = vmatpush1.msra.mxu0 %v58
    %280 = vmatprep.subr.mxu0 0.0
    %281 = vmatpush1.msra.mxu0 %v59
    %282 = vmatprep.subr.mxu0 0.0
    %283 = vmatpush1.msra.mxu0 %v60
    %284 = vmatprep.subr.mxu0 0.0
    %285 = vmatpush1.msra.mxu0 %v61
    %286 = vmatprep.subr.mxu0 0.0
    %287 = vmatpush1.msra.mxu0 0.0
    %288 = vmatprep.subr.mxu0 0.0
    %289 = vmatpush1.msra.mxu0 0.0
    %290 = vmatprep.subr.mxu0 0.0
    %291 = vmatpush1.msra.mxu0 0.0
    %292 = vmatprep.subr.mxu0 0.0
    %293 = vmatpush1.msra.mxu0 0.0
    %294 = vmatprep.subr.mxu0 0.0
    %295 = vmatpush1.msra.mxu0 0.0
    %296 = vmatprep.subr.mxu0 0.0
    %297 = vmatpush1.msra.mxu0 0.0
    %298 = vmatprep.subr.mxu0 0.0
    %299 = vmatpush1.msra.mxu0 0.0
    %300 = vmatprep.subr.mxu0 0.0
    %301 = vmatpush1.msra.mxu0 0.0
    %302 = vmatprep.subr.mxu0 0.0
    %303 = vmatpush1.msra.mxu0 0.0
    %304 = vmatprep.subr.mxu0 0.0
    %305 = vmatpush1.msra.mxu0 0.0
    %306 = vmatprep.subr.mxu0 0.0
    %307 = vmatpush1.msra.mxu0 0.0
    %308 = vmatprep.subr.mxu0 0.0
    %309 = vmatpush1.msra.mxu0 0.0
    %310 = vmatprep.subr.mxu0 0.0
    %311 = vmatpush1.msra.mxu0 0.0
    %312 = vmatprep.subr.mxu0 0.0
    %313 = vmatpush1.msra.mxu0 0.0
    %314 = vmatprep.subr.mxu0 0.0
    %315 = vmatpush1.msra.mxu0 0.0
    %316 = vmatprep.subr.mxu0 0.0
    %317 = vmatpush1.msra.mxu0 0.0
    %318 = vmatprep.mubr.f32.mxu0 0.0
    %319 = vmatmul.mubr.f32.gmra.mrb[0].mxu0 %v248
    %v320 = vpop.f32.mrb[0].mxu0
    %v321 = vadd.f32 %v253, %v320
    %v322 = vpop.f32.mrb[0].mxu0
    %323 = vmatprep.mubr.f32.mxu0 0.0
    %324 = vmatmul.mubr.f32.gmra.mrb[0].mxu0 %v249
    %v325 = vpop.f32.mrb[0].mxu0
    %v326 = vadd.f32 %v253, %v325
    %v327 = vpop.f32.mrb[0].mxu0
    %328 = vdwg.mxu0
    %v329 = vmax.f32 %v321, 0.0
    %v330 = vmax.f32 %v326, 0.0
    %v331 = vlaneseq
    %v332 = vshrl.u32 %v331, 7
    %v333 = vsub.s32 3, %v332
    %v334 = vrot.slane %v78, %v333
    %335 = vmatprep.subr.mxu0 0.0
    %336 = vmatpush1.msra.mxu0 %v62
    %337 = vmatprep.subr.mxu0 0.0
    %338 = vmatpush1.msra.mxu0 %v63
    %339 = vmatprep.subr.mxu0 0.0
    %340 = vmatpush1.msra.mxu0 %v64
    %341 = vmatprep.subr.mxu0 0.0
    %342 = vmatpush1.msra.mxu0 %v65
    %343 = vmatprep.subr.mxu0 0.0
    %344 = vmatpush1.msra.mxu0 %v66
    %345 = vmatprep.subr.mxu0 0.0
    %346 = vmatpush1.msra.mxu0 %v67
    %347 = vmatprep.subr.mxu0 0.0
    %348 = vmatpush1.msra.mxu0 %v68
    %349 = vmatprep.subr.mxu0 0.0
    %350 = vmatpush1.msra.mxu0 %v69
    %351 = vmatprep.subr.mxu0 0.0
    %352 = vmatpush1.msra.mxu0 %v70
    %353 = vmatprep.subr.mxu0 0.0
    %354 = vmatpush1.msra.mxu0 %v71
    %355 = vmatprep.subr.mxu0 0.0
    %356 = vmatpush1.msra.mxu0 %v72
    %357 = vmatprep.subr.mxu0 0.0
    %358 = vmatpush1.msra.mxu0 %v73
    %359 = vmatprep.subr.mxu0 0.0
    %360 = vmatpush1.msra.mxu0 %v74
    %361 = vmatprep.subr.mxu0 0.0
    %362 = vmatpush1.msra.mxu0 %v75
    %363 = vmatprep.subr.mxu0 0.0
    %364 = vmatpush1.msra.mxu0 %v76
    %365 = vmatprep.subr.mxu0 0.0
    %366 = vmatpush1.msra.mxu0 %v77
    %367 = vmatprep.subr.mxu0 0.0
    %368 = vmatpush1.msra.mxu0 0.0
    %369 = vmatprep.subr.mxu0 0.0
    %370 = vmatpush1.msra.mxu0 0.0
    %371 = vmatprep.subr.mxu0 0.0
    %372 = vmatpush1.msra.mxu0 0.0
    %373 = vmatprep.subr.mxu0 0.0
    %374 = vmatpush1.msra.mxu0 0.0
    %375 = vmatprep.subr.mxu0 0.0
    %376 = vmatpush1.msra.mxu0 0.0
    %377 = vmatprep.subr.mxu0 0.0
    %378 = vmatpush1.msra.mxu0 0.0
    %379 = vmatprep.subr.mxu0 0.0
    %380 = vmatpush1.msra.mxu0 0.0
    %381 = vmatprep.subr.mxu0 0.0
    %382 = vmatpush1.msra.mxu0 0.0
    %383 = vmatprep.subr.mxu0 0.0
    %384 = vmatpush1.msra.mxu0 0.0
    %385 = vmatprep.subr.mxu0 0.0
    %386 = vmatpush1.msra.mxu0 0.0
    %387 = vmatprep.subr.mxu0 0.0
    %388 = vmatpush1.msra.mxu0 0.0
    %389 = vmatprep.subr.mxu0 0.0
    %390 = vmatpush1.msra.mxu0 0.0
    %391 = vmatprep.subr.mxu0 0.0
    %392 = vmatpush1.msra.mxu0 0.0
    %393 = vmatprep.subr.mxu0 0.0
    %394 = vmatpush1.msra.mxu0 0.0
    %395 = vmatprep.subr.mxu0 0.0
    %396 = vmatpush1.msra.mxu0 0.0
    %397 = vmatprep.subr.mxu0 0.0
    %398 = vmatpush1.msra.mxu0 0.0
    %399 = vmatprep.mubr.f32.mxu0 0.0
    %400 = vmatmul.mubr.f32.gmra.mrb[0].mxu0 %v329
    %v401 = vpop.f32.mrb[0].mxu0
    %v402 = vadd.f32 %v334, %v401
    %v403 = vpop.f32.mrb[0].mxu0
    %404 = vmatprep.mubr.f32.mxu0 0.0
    %405 = vmatmul.mubr.f32.gmra.mrb[0].mxu0 %v330
    %v406 = vpop.f32.mrb[0].mxu0
    %v407 = vadd.f32 %v334, %v406
    %v408 = vpop.f32.mrb[0].mxu0
    %409 = vdwg.mxu0
    %410 = vst [vmem:[#allocation5] sm:$0xff] %v402
    %411 = vst [vmem:[#allocation5 + $0x8] sm:$0xff] %v407
    // Predicated region
    $region18: #{tpu_custom_call.1} parent=1 // pred_check
      _
    $region19: #{tpu_custom_call.1} parent=1 // pred_check_branch
      %413 = sbr.rel (0) target = $region21
    $region20: #{tpu_custom_call.1} parent=1 // pred_region
      %s415 = ssub.s32 256, 256
      %416 = vsyncadd [#allocation4], %s415
      %s417 = sshll.u32 [#allocation5], 4
      %s418 = int_to_ptr.vmem [resolvable:$true] %s417
      %423 = dma.vmem_to_hbm [thread:$0]  %s418, 256, %s3, [#allocation4], 128, 128, 8
    $region21: #{tpu_custom_call.1} parent=1 // pred_fallthru
      _
    // Predicated region
    $region22: #{tpu_custom_call.1} parent=1 // pred_check
      _
    $region23: #{tpu_custom_call.1} parent=1 // pred_check_branch
      %425 = sbr.rel (0) target = $region25
    $region24: #{tpu_custom_call.1} parent=1 // pred_region
      %426 = dma.done [#allocation4], 256
    $region25: #{tpu_custom_call.1} parent=1 // pred_fallthru
      _
    %427 = vsyncpa [#allocation3], 1
    %428 = vsyncpa [#allocation4], 1

</llo_original>
